<compile_context>
chip_gen: v7x
topology: tpu7x:2x2x1
jax: 0.10.0
libtpu: 0.0.40
codegen_flags: <defaults>
</compile_context>

<pallas_src>
import functools

import jax
import jax.numpy as jnp
import numpy as np
from jax.experimental import pallas as pl
from jax.experimental.pallas import tpu as pltpu


def _glu_out_kernel(x_ref, xbf_ref, w_ref, r_ref, p_ref, sel_ref,
                    out_ref, acc_ref):
    """K-tiled fused GlobalGluOut.

    Per K step: one bf16 MXU matmul of the x K-slice against the K-tiled fused
    [W1_k | W2_k] weight slab, accumulated into a persistent f32 VMEM scratch.
    At k == last: per-field reduction via a skinny (D, n_f) bf16 matmul, lane
    spread via an (n_f, D) bf16 matmul, one-hot sublane select (XLU reduce),
    EUP sigmoid, and one lane-dense full-block store.
    """
    k = pl.program_id(0)

    @pl.when(k == 0)
    def _init():
        acc_ref[...] = jnp.zeros_like(acc_ref)

    # acc += x_k @ [W1_k | W2_k]   (bf16 operands, f32 accumulation on the MXU).
    acc_ref[...] += jnp.dot(xbf_ref[...], w_ref[...],
                            preferred_element_type=jnp.float32)

    @pl.when(k == pl.num_programs(0) - 1)
    def _epilogue():
        x2d = x_ref[...]                         # (B, D) f32, resident
        d = x2d.shape[1]
        kp = acc_ref[...]                        # (B, 2D) f32
        kp1 = kp[:, :d]                          # D % 128 == 0 -> aligned slices
        kp2 = kp[:, d:]

        # s[b, f] = sum_{d': d'//e == f} (kp1 * x)[b, d']          -> (B, n_f)
        y = (kp1 * x2d).astype(jnp.bfloat16)
        s = jnp.dot(y, r_ref[...], preferred_element_type=jnp.float32)
        # t[b, d'] = s[b, d' % e]   (lane spread)                  -> (B, D)
        t = jnp.dot(s.astype(jnp.bfloat16), p_ref[...],
                    preferred_element_type=jnp.float32)
        # Literal PyTorch broadcast: gate[d'] = sigmoid(s[d'//e, d'%e]), batch-free.
        # sel[b, d'] = 1 iff b == d'//e  (precomputed one-hot) -> sublane select.
        g_arg = jnp.sum(t * sel_ref[...], axis=0, keepdims=True)   # (1, D)
        gate = pl.reciprocal(1.0 + jnp.exp(-g_arg), approx=True)   # sigmoid, EUP

        # out = x * (1 - gate) + (kp2 * x) * gate  -- single lane-dense store.
        out_ref[...] = x2d + (kp2 * x2d - x2d) * gate


def prepare_global_glu_out_params(kernel1, kernel2, compute_dtype=jnp.bfloat16):
    """One-time (per parameter set) preprocessing, hoisted out of the call path."""
    e, n_f, d = kernel1.shape
    assert d == n_f * e and kernel2.shape == (e, n_f, d)
    # Fused, pre-transposed weights:  W[d, f*e + j] = kernel[j, f, d];  W = [W1 | W2].
    w1 = jnp.transpose(kernel1, (2, 1, 0)).reshape(d, d)
    w2 = jnp.transpose(kernel2, (2, 1, 0)).reshape(d, d)
    w = jnp.concatenate([w1, w2], axis=1).astype(compute_dtype)        # (D, 2D)
    # TODO(synk): optional weight quantization of W (int8 on v5e/v6e, fp8 on v7x)
    # would halve the dominant weight-streaming bytes.
    rows = jnp.arange(d)
    # Skinny per-field reduction matrix (0/1 exact in bf16): R[d', f] = 1 iff d'//e == f.
    r = (rows[:, None] // e == jnp.arange(n_f)[None, :]).astype(compute_dtype)   # (D, n_f)
    # Lane-spread matrix: P[f, d'] = 1 iff f == d' % e.
    p = (jnp.arange(n_f)[:, None] == rows[None, :] % e).astype(compute_dtype)    # (n_f, D)
    # One-hot sublane-select mask for the degenerate gate broadcast (B == n_f):
    # sel[b, d'] = 1 iff b == d'//e.
    sel = (jnp.arange(n_f)[:, None] == rows[None, :] // e).astype(jnp.float32)   # (B, D)
    return w, r, p, sel


def _vmem_budget_bytes():
    """Target ~60% of physical VMEM (v5e/v6e: 128 MiB, v7x: 64 MiB), capped."""
    try:
        phys = pltpu.get_tpu_info().vmem_capacity_bytes
    except Exception:
        phys = 64 * 1024 * 1024          # conservative fallback (v7x-sized)
    return min(int(phys * 0.6), 96 * 1024 * 1024)


def _resident_bytes(b, d, n_f):
    return (b * 2 * d * 4        # f32 accumulator scratch
            + b * d * 4          # resident f32 x block
            + b * d * 4          # resident output block
            + b * d * 4          # sel mask
            + 2 * d * n_f * 2)   # R + P (bf16)


def _choose_k_tile(b, d, n_f, budget):
    """Largest 128-multiple K tile whose double-buffered streams fit the budget."""
    best = 128
    for tk in range(128, d + 1, 128):
        if d % tk:
            continue
        streamed = 2 * (tk * 2 * d * 2 + b * tk * 2)   # dbl-buffered W slab + bf16 x slab
        if _resident_bytes(b, d, n_f) + streamed <= budget:
            best = tk
    return best


@functools.partial(jax.jit, static_argnames=("k_tile",))
def global_glu_out_apply(x, w, r, p, sel, *, k_tile=None):
    """Apply GlobalGluOut with pre-prepared (w, r, p, sel) parameters."""
    b, n_f, e = x.shape
    d = n_f * e
    # The module's final broadcast only type-checks (and has these semantics)
    # when B == field_length == embed_dim — fail loudly otherwise.
    assert b == n_f == e, (
        "GlobalGluOut's final broadcast requires B == field_length == embed_dim")
    assert d % 128 == 0, (
        "D = field_length * embed_dim must be a multiple of 128 for lane-dense tiles"
    )  # TODO(synk): zero-pad D to the next multiple of 128 to support odd sizes.
    assert w.shape == (d, 2 * d) and r.shape == (d, n_f)
    assert p.shape == (n_f, d) and sel.shape == (b, d)

    budget = _vmem_budget_bytes()
    tk = k_tile if k_tile is not None else _choose_k_tile(b, d, n_f, budget)
    assert d % tk == 0 and tk % 128 == 0
    nk = d // tk

    x2d = x.reshape(b, d).astype(jnp.float32)
    x2d_bf = x2d.astype(jnp.bfloat16)

    cost = pl.CostEstimate(
        flops=2 * b * d * 2 * d + 2 * b * d * n_f + 2 * b * n_f * d + 8 * b * d,
        transcendentals=d,
        bytes_accessed=(d * 2 * d * 2      # W (bf16)
                        + b * d * 4        # x f32
                        + b * d * 2        # x bf16
                        + 2 * d * n_f * 2  # R + P
                        + b * d * 4        # sel
                        + b * d * 4),      # out
    )

    out2d = pl.pallas_call(
        _glu_out_kernel,
        out_shape=jax.ShapeDtypeStruct((b, d), jnp.float32),
        grid=(nk,),
        in_specs=[
            pl.BlockSpec((b, d), lambda k: (0, 0)),        # x (f32), resident for epilogue
            pl.BlockSpec((b, tk), lambda k: (0, k)),       # x (bf16), K-streamed matmul LHS
            pl.BlockSpec((tk, 2 * d), lambda k: (k, 0)),   # fused [W1 | W2] bf16, K-streamed
            pl.BlockSpec((d, n_f), lambda k: (0, 0)),      # R (per-field reduction)
            pl.BlockSpec((n_f, d), lambda k: (0, 0)),      # P (lane spread)
            pl.BlockSpec((b, d), lambda k: (0, 0)),        # sel (one-hot sublane select)
        ],
        out_specs=pl.BlockSpec((b, d), lambda k: (0, 0)),  # resident, stored at k == last
        scratch_shapes=[pltpu.VMEM((b, 2 * d), jnp.float32)],
        compiler_params=pltpu.CompilerParams(
            dimension_semantics=("arbitrary",),            # K is a reduction axis
            vmem_limit_bytes=budget,
        ),
        cost_estimate=cost,
    )(x2d, x2d_bf, w, r, p, sel)
    # TODO(synk): for very large D, additionally tile the 2D output columns (grid axis j
    # with per-tile interleaved [W1_j | W2_j], marked "parallel" for v7x megacore) and
    # finish the gate in a tiny second pass — the degenerate B==n_f==e gate couples all
    # column tiles, so it cannot be finalized per-column-tile inside this kernel.
    return out2d.reshape(b, n_f, e)


def global_glu_out(x, kernel1, kernel2):
    """Convenience wrapper: prepare params (cached in real use) + apply."""
    w, r, p, sel = prepare_global_glu_out_params(kernel1, kernel2)
    return global_glu_out_apply(x, w, r, p, sel)


def ref_global_glu_out(x, kernel1, kernel2):
    """Pure-JAX literal transcription of the PyTorch forward (for checking)."""
    b, n_f, e = x.shape
    d = n_f * e
    x_fc = jnp.broadcast_to(x.reshape(b, 1, d), (b, n_f, d))
    kp1 = jnp.transpose(jnp.sum(x_fc[:, None, :, :] * kernel1, axis=-1), (0, 2, 1))
    x_pro = jax.nn.sigmoid(jnp.sum(kp1 * x, -1))
    kp2 = jnp.transpose(jnp.sum(x_fc[:, None, :, :] * kernel2, axis=-1), (0, 2, 1))
    x_out = kp2 * x
    return x * (1.0 - x_pro) + x_out * x_pro


if __name__ == "__main__":
    # B == field_length == embed_dim is required by the module's literal broadcast;
    # 16*16 = 256 keeps D a (small) multiple of 128 for lane-dense, tile-aligned blocks.
    B = FIELD = EMBED = 16
    D = FIELD * EMBED

    key = jax.random.PRNGKey(0)
    kx, k1, k2 = jax.random.split(key, 3)
    x = jax.random.normal(kx, (B, FIELD, EMBED), dtype=jnp.float32)

    # xavier_uniform_ for shape (embed_dim, field_length, D):
    #   fan_in = field_length * D, fan_out = embed_dim * D
    bound = float(np.sqrt(6.0 / (FIELD * D + EMBED * D)))
    kernel1 = jax.random.uniform(k1, (EMBED, FIELD, D), jnp.float32, -bound, bound)
    kernel2 = jax.random.uniform(k2, (EMBED, FIELD, D), jnp.float32, -bound, bound)

    # Hoist the weight transpose / fusion / gate matrices out of the per-call path.
    w, r, p, sel = prepare_global_glu_out_params(kernel1, kernel2)

    ref = jax.block_until_ready(ref_global_glu_out(x, kernel1, kernel2))

    # Exercise both the multi-step K pipeline (2 K tiles) and the auto-sized path.
    out_tiled = jax.block_until_ready(global_glu_out_apply(x, w, r, p, sel, k_tile=128))
    out_auto = jax.block_until_ready(global_glu_out_apply(x, w, r, p, sel))

    np.testing.assert_allclose(np.asarray(out_tiled), np.asarray(ref),
                               rtol=2e-2, atol=2e-2)
    np.testing.assert_allclose(np.asarray(out_auto), np.asarray(ref),
                               rtol=2e-2, atol=2e-2)
    print("KERNEL_OK")
</pallas_src>

<mosaic_0001>
module attributes {stable_mosaic.version = 11 : i64} {
  func.func @_glu_out_kernel(%arg0: i32, %arg1: memref<16x256xf32, #tpu.memory_space<vmem>>, %arg2: memref<16x128xbf16, #tpu.memory_space<vmem>>, %arg3: memref<128x512xbf16, #tpu.memory_space<vmem>>, %arg4: memref<256x16xbf16, #tpu.memory_space<vmem>>, %arg5: memref<16x256xbf16, #tpu.memory_space<vmem>>, %arg6: memref<16x256xf32, #tpu.memory_space<vmem>>, %arg7: memref<16x256xf32, #tpu.memory_space<vmem>>, %arg8: memref<16x512xf32, #tpu.memory_space<vmem>>) attributes {dimension_semantics = [#tpu.dimension_semantics<arbitrary>], iteration_bounds = array<i64: 2>, scalar_prefetch = 0 : i64, scratch_operands = 1 : i64, tpu.core_type = #tpu.core_type<tc>, window_params = [{pipeline_mode = #tpu.pipeline_mode<synchronous>, transform_indices = @transform_0, window_bounds = array<i64: 16, 256>}, {transform_indices = @transform_1, window_bounds = array<i64: 16, 128>}, {transform_indices = @transform_2, window_bounds = array<i64: 128, 512>}, {pipeline_mode = #tpu.pipeline_mode<synchronous>, transform_indices = @transform_3, window_bounds = array<i64: 256, 16>}, {pipeline_mode = #tpu.pipeline_mode<synchronous>, transform_indices = @transform_4, window_bounds = array<i64: 16, 256>}, {pipeline_mode = #tpu.pipeline_mode<synchronous>, transform_indices = @transform_5, window_bounds = array<i64: 16, 256>}, {pipeline_mode = #tpu.pipeline_mode<synchronous>, transform_indices = @transform_6, window_bounds = array<i64: 16, 256>}]} {
    %c0_i32 = arith.constant 0 : i32
    %0 = arith.cmpi eq, %arg0, %c0_i32 : i32
    %1 = arith.extui %0 : i1 to i32
    %c0_i32_0 = arith.constant 0 : i32
    %2 = arith.cmpi ne, %1, %c0_i32_0 : i32
    scf.if %2 {
      %cst_9 = arith.constant 0.000000e+00 : f32
      %12 = vector.broadcast %cst_9 : f32 to vector<16x512xf32>
      %c0_10 = arith.constant 0 : index
      %c0_11 = arith.constant 0 : index
      %13 = vector.load %arg8[%c0_10, %c0_11] : memref<16x512xf32, #tpu.memory_space<vmem>>, vector<16x512xf32>
      tpu.vector_store %arg8[%c0_10, %c0_11], %12 {strides = array<i32>} : memref<16x512xf32, #tpu.memory_space<vmem>>, vector<16x512xf32>,
    } else {
    }
    %c0 = arith.constant 0 : index
    %c0_1 = arith.constant 0 : index
    %3 = vector.load %arg8[%c0, %c0_1] : memref<16x512xf32, #tpu.memory_space<vmem>>, vector<16x512xf32>
    %c0_2 = arith.constant 0 : index
    %c0_3 = arith.constant 0 : index
    %4 = vector.load %arg2[%c0_2, %c0_3] : memref<16x128xbf16, #tpu.memory_space<vmem>>, vector<16x128xbf16>
    %c0_4 = arith.constant 0 : index
    %c0_5 = arith.constant 0 : index
    %5 = vector.load %arg3[%c0_4, %c0_5] : memref<128x512xbf16, #tpu.memory_space<vmem>>, vector<128x512xbf16>
    %cst = arith.constant dense<0.000000e+00> : vector<16x512xf32>
    %6 = tpu.matmul %4, %5, %cst {dimension_numbers = #tpu.dot_dimension_numbers<[1], [0], [0], [1], [0, 0, 1, 1], [], []>} : vector<16x128xbf16>, vector<128x512xbf16>, vector<16x512xf32> -> vector<16x512xf32>
    %7 = arith.addf %3, %6 : vector<16x512xf32>
    %c0_6 = arith.constant 0 : index
    %c0_7 = arith.constant 0 : index
    %8 = vector.load %arg8[%c0_6, %c0_7] : memref<16x512xf32, #tpu.memory_space<vmem>>, vector<16x512xf32>
    tpu.vector_store %arg8[%c0_6, %c0_7], %7 {strides = array<i32>} : memref<16x512xf32, #tpu.memory_space<vmem>>, vector<16x512xf32>,
    %c1_i32 = arith.constant 1 : i32
    %9 = arith.cmpi eq, %arg0, %c1_i32 : i32
    %10 = arith.extui %9 : i1 to i32
    %c0_i32_8 = arith.constant 0 : i32
    %11 = arith.cmpi ne, %10, %c0_i32_8 : i32
    scf.if %11 {
      %c0_9 = arith.constant 0 : index
      %c0_10 = arith.constant 0 : index
      %12 = vector.load %arg1[%c0_9, %c0_10] : memref<16x256xf32, #tpu.memory_space<vmem>>, vector<16x256xf32>
      %c0_11 = arith.constant 0 : index
      %c0_12 = arith.constant 0 : index
      %13 = vector.load %arg8[%c0_11, %c0_12] : memref<16x512xf32, #tpu.memory_space<vmem>>, vector<16x512xf32>
      %14 = vector.extract_strided_slice %13 {offsets = [0, 0], sizes = [16, 256], strides = [1, 1]} : vector<16x512xf32> to vector<16x256xf32>
      %15 = vector.extract_strided_slice %13 {offsets = [0, 256], sizes = [16, 256], strides = [1, 1]} : vector<16x512xf32> to vector<16x256xf32>
      %16 = arith.mulf %14, %12 : vector<16x256xf32>
      %17 = arith.truncf %16 : vector<16x256xf32> to vector<16x256xbf16>
      %c0_13 = arith.constant 0 : index
      %c0_14 = arith.constant 0 : index
      %18 = vector.load %arg4[%c0_13, %c0_14] : memref<256x16xbf16, #tpu.memory_space<vmem>>, vector<256x16xbf16>
      %cst_15 = arith.constant dense<0.000000e+00> : vector<16x16xf32>
      %19 = tpu.matmul %17, %18, %cst_15 {dimension_numbers = #tpu.dot_dimension_numbers<[1], [0], [0], [1], [0, 0, 1, 1], [], []>} : vector<16x256xbf16>, vector<256x16xbf16>, vector<16x16xf32> -> vector<16x16xf32>
      %20 = arith.truncf %19 : vector<16x16xf32> to vector<16x16xbf16>
      %c0_16 = arith.constant 0 : index
      %c0_17 = arith.constant 0 : index
      %21 = vector.load %arg5[%c0_16, %c0_17] : memref<16x256xbf16, #tpu.memory_space<vmem>>, vector<16x256xbf16>
      %cst_18 = arith.constant dense<0.000000e+00> : vector<16x256xf32>
      %22 = tpu.matmul %20, %21, %cst_18 {dimension_numbers = #tpu.dot_dimension_numbers<[1], [0], [0], [1], [0, 0, 1, 1], [], []>} : vector<16x16xbf16>, vector<16x256xbf16>, vector<16x256xf32> -> vector<16x256xf32>
      %c0_19 = arith.constant 0 : index
      %c0_20 = arith.constant 0 : index
      %23 = vector.load %arg6[%c0_19, %c0_20] : memref<16x256xf32, #tpu.memory_space<vmem>>, vector<16x256xf32>
      %24 = arith.mulf %22, %23 : vector<16x256xf32>
      %cst_21 = arith.constant dense<0.000000e+00> : vector<256xf32>
      %25 = vector.multi_reduction <add>, %24, %cst_21 [0] : vector<16x256xf32> to vector<256xf32>
      %26 = vector.shape_cast %25 : vector<256xf32> to vector<1x256xf32>
      %cst_22 = arith.constant 0.000000e+00 : f32
      %27 = vector.broadcast %cst_22 : f32 to vector<1x256xf32>
      %28 = arith.subf %27, %26 : vector<1x256xf32>
      %29 = math.exp %28 : vector<1x256xf32>
      %cst_23 = arith.constant 1.000000e+00 : f32
      %30 = vector.broadcast %cst_23 : f32 to vector<1x256xf32>
      %31 = arith.addf %30, %29 : vector<1x256xf32>
      %32 = tpu.reciprocal %31 {approx = true} : vector<1x256xf32> -> vector<1x256xf32>
      %33 = arith.mulf %15, %12 : vector<16x256xf32>
      %34 = arith.subf %33, %12 : vector<16x256xf32>
      %35 = vector.broadcast %32 : vector<1x256xf32> to vector<16x256xf32>
      %36 = arith.mulf %34, %35 : vector<16x256xf32>
      %37 = arith.addf %12, %36 : vector<16x256xf32>
      %c0_24 = arith.constant 0 : index
      %c0_25 = arith.constant 0 : index
      %38 = vector.load %arg7[%c0_24, %c0_25] : memref<16x256xf32, #tpu.memory_space<vmem>>, vector<16x256xf32>
      tpu.vector_store %arg7[%c0_24, %c0_25], %37 {strides = array<i32>} : memref<16x256xf32, #tpu.memory_space<vmem>>, vector<16x256xf32>,
    } else {
    }
    return
  }
  func.func @transform_0(%arg0: i32) -> (i32, i32) {
    %c0_i32 = arith.constant 0 : i32
    %c0_i32_0 = arith.constant 0 : i32
    %c0_i32_1 = arith.constant 0 : i32
    return %c0_i32, %c0_i32_0 : i32, i32
  }
  func.func @transform_1(%arg0: i32) -> (i32, i32) {
    %c0_i32 = arith.constant 0 : i32
    %c0_i32_0 = arith.constant 0 : i32
    return %c0_i32, %arg0 : i32, i32
  }
  func.func @transform_2(%arg0: i32) -> (i32, i32) {
    %c0_i32 = arith.constant 0 : i32
    %c0_i32_0 = arith.constant 0 : i32
    return %arg0, %c0_i32 : i32, i32
  }
  func.func @transform_3(%arg0: i32) -> (i32, i32) {
    %c0_i32 = arith.constant 0 : i32
    %c0_i32_0 = arith.constant 0 : i32
    %c0_i32_1 = arith.constant 0 : i32
    return %c0_i32, %c0_i32_0 : i32, i32
  }
  func.func @transform_4(%arg0: i32) -> (i32, i32) {
    %c0_i32 = arith.constant 0 : i32
    %c0_i32_0 = arith.constant 0 : i32
    %c0_i32_1 = arith.constant 0 : i32
    return %c0_i32, %c0_i32_0 : i32, i32
  }
  func.func @transform_5(%arg0: i32) -> (i32, i32) {
    %c0_i32 = arith.constant 0 : i32
    %c0_i32_0 = arith.constant 0 : i32
    %c0_i32_1 = arith.constant 0 : i32
    return %c0_i32, %c0_i32_0 : i32, i32
  }
  func.func @transform_6(%arg0: i32) -> (i32, i32) {
    %c0_i32 = arith.constant 0 : i32
    %c0_i32_0 = arith.constant 0 : i32
    %c0_i32_1 = arith.constant 0 : i32
    return %c0_i32, %c0_i32_0 : i32, i32
  }
}

</mosaic_0001>

<llo_original>
// kernel: global_glu_out_apply.1
$region0: #{global_glu_out_apply.1}
  #allocation0 [shape = 'u32[]', space=smem, size = 0x4, offset = 0x4, fixed_abs, tag = 'smem constant byte address 0x4 - core index']
  #allocation1 [shape = 'u32[144,128]{1,0:T(1,128)}', space=vmem, size = 0x12000, scoped, tag = 'internal scratch']
  #allocation2 [shape = 'f32[16,512]{1,0:T(8,128)}', space=vmem, size = 0x8000, scoped, tag = 'scratch operand']
  %s0 = inlined_call_operand.vmem [shape: f32[16,256], index: 0, kind: input, shape index: {}]
  %s1 = inlined_call_operand.vmem [shape: bf16[16,256], index: 1, kind: input, shape index: {}]
  %s2 = inlined_call_operand.hbm [shape: bf16[256,512], index: 2, kind: input, shape index: {}]
  %s3 = inlined_call_operand.vmem [shape: bf16[256,16], index: 3, kind: input, shape index: {}]
  %s4 = inlined_call_operand.vmem [shape: bf16[16,256], index: 4, kind: input, shape index: {}]
  %s5 = inlined_call_operand.vmem [shape: f32[16,256], index: 5, kind: input, shape index: {}]
  %s6 = inlined_call_operand.vmem [shape: f32[16,256], index: 6, kind: output, shape index: {}]
  %s7 = sld [smem:[#allocation0]]
  $region110: #{global_glu_out_apply.1} parent=0
    _
  %s9 = ssub.s32 1, %s7
  %s10 = scalar_select 0, %s9, %s7
  $region1: #{global_glu_out_apply.1} parent=0
    #allocation3 [shape = 'u8[8192]{0}', space=vmem, size = 0x2000, scoped, tag = 'input window, operand 1']
    #allocation4 [shape = 'u8[262144]{0}', space=vmem, size = 0x40000, scoped, tag = 'input window, operand 2']
    #allocation5 [shape = 's32[2]{0}', space=sflag, size = 0x8, scoped, tag = 'scoped memory for global_glu_out_apply.1']
    %11 = vsyncpa [#allocation5], 0
    %s12 = scalar_lea.sflag [#allocation5], 1
    %13 = vsyncpa %s12, 0
    loop: start=0, step=1, limit=4
    $region2: #{global_glu_out_apply.1} parent=1 // loop_pre_header
      _
    $region3: #{global_glu_out_apply.1} parent=1 // loop_header
      %s15 = sphi 0, %s19
      %p16 = scmp.ge.s32.totalorder %s15, 4
      %s23 = sphi 0, %s23
      %s25 = sphi 0, %s23
      %s26 = sphi 0, %s25
      %s40 = sphi 0, %s26
      %s46 = sphi 0, %s48
      %s49 = sphi 0, %s46
      %s50 = sphi 0, %s49
      %s66 = sphi 0, %s50
      %s72 = sphi 0, %s74
      %s75 = sphi 0, %s72
      %s76 = sphi 0, %s75
      %s92 = sphi 0, %s76
      %s96 = sphi 0, %s96
      %s98 = sphi 0, %s96
      %s99 = sphi 0, %s98
      %s113 = sphi 0, %s99
      %s117 = sphi 0, %s117
      %s119 = sphi 0, %s117
      %s120 = sphi 0, %s119
      %s134 = sphi 0, %s120
      %s138 = sphi 0, %s138
      %s140 = sphi 0, %s138
      %s141 = sphi 0, %s140
      %s155 = sphi 0, %s141
      %s159 = sphi 0, %s159
      %s161 = sphi 0, %s159
      %s162 = sphi 0, %s161
      %s176 = sphi 0, %s162
    $region4: #{global_glu_out_apply.1} parent=1 // loop_header_branch
      %18 = sbr.rel (%p16) target = $region8
    $region5: #{global_glu_out_apply.1} parent=1 // loop_body
      %s20 = ssub.s32 %s15, 1
      %s21 = ssub.s32 %s15, 2
      %s22 = sadd.s32 %s15, 1
      %s24 = sadd.s32 %s23, 1
      %p27 = scmp.eq.s32.totalorder %s15, 1
      %p28 = scmp.ne.s32.totalorder %s23, %s25
      %p29 = scmp.eq.s32.totalorder %s15, 0
      %p30 = por %p28, %p29
      %p31 = scmp.ne.s32.totalorder %s23, %s25
      %p32 = scmp.eq.s32.totalorder %s20, 1
      %p33 = por %p31, %p32
      %p34 = scmp.ne.s32.totalorder %s25, %s26
      %p35 = scmp.eq.s32.totalorder %s20, 0
      %p36 = por %p34, %p35
      %p37 = scmp.ne.s32.totalorder %s25, %s26
      %p38 = scmp.eq.s32.totalorder %s21, 1
      %p39 = por %p37, %p38
      %p41 = scmp.ne.s32.totalorder %s26, %s40
      %p42 = scmp.eq.s32.totalorder %s21, 0
      %p43 = por %p41, %p42
      %s44 = ssub.s32 %s15, %s22
      %p45 = scmp.eq.s32.totalorder %s44, 0
      %s47 = sadd.s32 %s46, 1
      %s48 = scalar_select %p45, %s46, %s47
      %p51 = pneg %p45
      %p52 = scmp.eq.s32.totalorder %s15, 1
      %p53 = por %p51, %p52
      %p54 = scmp.ne.s32.totalorder %s46, %s49
      %p55 = scmp.eq.s32.totalorder %s15, 0
      %p56 = por %p54, %p55
      %p57 = scmp.ne.s32.totalorder %s46, %s49
      %p58 = scmp.eq.s32.totalorder %s20, 1
      %p59 = por %p57, %p58
      %p60 = scmp.ne.s32.totalorder %s49, %s50
      %p61 = scmp.eq.s32.totalorder %s20, 0
      %p62 = por %p60, %p61
      %p63 = scmp.ne.s32.totalorder %s49, %s50
      %p64 = scmp.eq.s32.totalorder %s21, 1
      %p65 = por %p63, %p64
      %p67 = scmp.ne.s32.totalorder %s50, %s66
      %p68 = scmp.eq.s32.totalorder %s21, 0
      %p69 = por %p67, %p68
      %s70 = ssub.s32 %s15, %s22
      %p71 = scmp.eq.s32.totalorder %s70, 0
      %s73 = sadd.s32 %s72, 1
      %s74 = scalar_select %p71, %s72, %s73
      %p77 = pneg %p71
      %p78 = scmp.eq.s32.totalorder %s15, 1
      %p79 = por %p77, %p78
      %p80 = scmp.ne.s32.totalorder %s72, %s75
      %p81 = scmp.eq.s32.totalorder %s15, 0
      %p82 = por %p80, %p81
      %p83 = scmp.ne.s32.totalorder %s72, %s75
      %p84 = scmp.eq.s32.totalorder %s20, 1
      %p85 = por %p83, %p84
      %p86 = scmp.ne.s32.totalorder %s75, %s76
      %p87 = scmp.eq.s32.totalorder %s20, 0
      %p88 = por %p86, %p87
      %p89 = scmp.ne.s32.totalorder %s75, %s76
      %p90 = scmp.eq.s32.totalorder %s21, 1
      %p91 = por %p89, %p90
      %p93 = scmp.ne.s32.totalorder %s76, %s92
      %p94 = scmp.eq.s32.totalorder %s21, 0
      %p95 = por %p93, %p94
      %s97 = sadd.s32 %s96, 1
      %p100 = scmp.eq.s32.totalorder %s15, 1
      %p101 = scmp.ne.s32.totalorder %s96, %s98
      %p102 = scmp.eq.s32.totalorder %s15, 0
      %p103 = por %p101, %p102
      %p104 = scmp.ne.s32.totalorder %s96, %s98
      %p105 = scmp.eq.s32.totalorder %s20, 1
      %p106 = por %p104, %p105
      %p107 = scmp.ne.s32.totalorder %s98, %s99
      %p108 = scmp.eq.s32.totalorder %s20, 0
      %p109 = por %p107, %p108
      %p110 = scmp.ne.s32.totalorder %s98, %s99
      %p111 = scmp.eq.s32.totalorder %s21, 1
      %p112 = por %p110, %p111
      %p114 = scmp.ne.s32.totalorder %s99, %s113
      %p115 = scmp.eq.s32.totalorder %s21, 0
      %p116 = por %p114, %p115
      %s118 = sadd.s32 %s117, 1
      %p121 = scmp.eq.s32.totalorder %s15, 1
      %p122 = scmp.ne.s32.totalorder %s117, %s119
      %p123 = scmp.eq.s32.totalorder %s15, 0
      %p124 = por %p122, %p123
      %p125 = scmp.ne.s32.totalorder %s117, %s119
      %p126 = scmp.eq.s32.totalorder %s20, 1
      %p127 = por %p125, %p126
      %p128 = scmp.ne.s32.totalorder %s119, %s120
      %p129 = scmp.eq.s32.totalorder %s20, 0
      %p130 = por %p128, %p129
      %p131 = scmp.ne.s32.totalorder %s119, %s120
      %p132 = scmp.eq.s32.totalorder %s21, 1
      %p133 = por %p131, %p132
      %p135 = scmp.ne.s32.totalorder %s120, %s134
      %p136 = scmp.eq.s32.totalorder %s21, 0
      %p137 = por %p135, %p136
      %s139 = sadd.s32 %s138, 1
      %p142 = scmp.eq.s32.totalorder %s15, 1
      %p143 = scmp.ne.s32.totalorder %s138, %s140
      %p144 = scmp.eq.s32.totalorder %s15, 0
      %p145 = por %p143, %p144
      %p146 = scmp.ne.s32.totalorder %s138, %s140
      %p147 = scmp.eq.s32.totalorder %s20, 1
      %p148 = por %p146, %p147
      %p149 = scmp.ne.s32.totalorder %s140, %s141
      %p150 = scmp.eq.s32.totalorder %s20, 0
      %p151 = por %p149, %p150
      %p152 = scmp.ne.s32.totalorder %s140, %s141
      %p153 = scmp.eq.s32.totalorder %s21, 1
      %p154 = por %p152, %p153
      %p156 = scmp.ne.s32.totalorder %s141, %s155
      %p157 = scmp.eq.s32.totalorder %s21, 0
      %p158 = por %p156, %p157
      %s160 = sadd.s32 %s159, 1
      %p163 = scmp.eq.s32.totalorder %s15, 1
      %p164 = scmp.ne.s32.totalorder %s159, %s161
      %p165 = scmp.eq.s32.totalorder %s15, 0
      %p166 = por %p164, %p165
      %p167 = scmp.ne.s32.totalorder %s159, %s161
      %p168 = scmp.eq.s32.totalorder %s20, 1
      %p169 = por %p167, %p168
      %p170 = scmp.ne.s32.totalorder %s161, %s162
      %p171 = scmp.eq.s32.totalorder %s20, 0
      %p172 = por %p170, %p171
      %p173 = scmp.ne.s32.totalorder %s161, %s162
      %p174 = scmp.eq.s32.totalorder %s21, 1
      %p175 = por %p173, %p174
      %p177 = scmp.ne.s32.totalorder %s162, %s176
      %p178 = scmp.eq.s32.totalorder %s21, 0
      %p179 = por %p177, %p178
      %p180 = scmp.le.s32.totalorder 1, %s15
      %p181 = scmp.lt.s32.totalorder %s15, 3
      %p182 = pnand %p180, %p181
      %p183 = pneg %p182
      // Predicated region
      $region9: #{global_glu_out_apply.1} parent=5 // pred_check
        _
      $region10: #{global_glu_out_apply.1} parent=5 // pred_check_branch
        %185 = sbr.rel (%p182) target = $region12
      $region11: #{global_glu_out_apply.1} parent=5 // pred_region
        %s186 = ssub.s32 %s15, 1
        // Predicated region
        $region13: #{global_glu_out_apply.1} parent=11 // pred_check
          %p187 = pneg %p36
        $region14: #{global_glu_out_apply.1} parent=11 // pred_check_branch
          %189 = sbr.rel (%p187) target = $region16
        $region15: #{global_glu_out_apply.1} parent=11 // pred_region
          _
        $region16: #{global_glu_out_apply.1} parent=11 // pred_fallthru
          _
        // Predicated region
        $region17: #{global_glu_out_apply.1} parent=11 // pred_check
          %p190 = pneg %p109
        $region18: #{global_glu_out_apply.1} parent=11 // pred_check_branch
          %192 = sbr.rel (%p190) target = $region20
        $region19: #{global_glu_out_apply.1} parent=11 // pred_region
          _
        $region20: #{global_glu_out_apply.1} parent=11 // pred_fallthru
          _
        // Predicated region
        $region21: #{global_glu_out_apply.1} parent=11 // pred_check
          %p193 = pneg %p130
        $region22: #{global_glu_out_apply.1} parent=11 // pred_check_branch
          %195 = sbr.rel (%p193) target = $region24
        $region23: #{global_glu_out_apply.1} parent=11 // pred_region
          _
        $region24: #{global_glu_out_apply.1} parent=11 // pred_fallthru
          _
        // Predicated region
        $region25: #{global_glu_out_apply.1} parent=11 // pred_check
          %p196 = pneg %p151
        $region26: #{global_glu_out_apply.1} parent=11 // pred_check_branch
          %198 = sbr.rel (%p196) target = $region28
        $region27: #{global_glu_out_apply.1} parent=11 // pred_region
          _
        $region28: #{global_glu_out_apply.1} parent=11 // pred_fallthru
          _
      $region12: #{global_glu_out_apply.1} parent=5 // pred_fallthru
        _
      %p199 = scmp.lt.s32.totalorder %s15, 2
      // Predicated region
      $region29: #{global_glu_out_apply.1} parent=5 // pred_check
        %p200 = pneg %p199
      $region30: #{global_glu_out_apply.1} parent=5 // pred_check_branch
        %202 = sbr.rel (%p200) target = $region32
      $region31: #{global_glu_out_apply.1} parent=5 // pred_region
        // Predicated region
        $region33: #{global_glu_out_apply.1} parent=31 // pred_check
          %p203 = pneg %p56
        $region34: #{global_glu_out_apply.1} parent=31 // pred_check_branch
          %205 = sbr.rel (%p203) target = $region36
        $region35: #{global_glu_out_apply.1} parent=31 // pred_region
          %s206 = sand.u32 %s46, 1
          %s207 = sand.u32 %s46, 1
          %s208 = smul.addr %s207, 8
          %s209 = scalar_lea.vmem [#allocation3], %s208
          %s210 = smul.addr %s15, 4
          %s211 = scalar_lea.vmem %s1, %s210
          // Predicated region
          $region37: #{global_glu_out_apply.1} parent=35 // pred_check
            _
          $region38: #{global_glu_out_apply.1} parent=35 // pred_check_branch
            %213 = sbr.rel (0) target = $region40
          $region39: #{global_glu_out_apply.1} parent=35 // pred_region
            // Predicated region
            $region41: #{global_glu_out_apply.1} parent=39 // pred_check
              _
            $region42: #{global_glu_out_apply.1} parent=39 // pred_check_branch
              %215 = sbr.rel target = $region44
            $region43: #{global_glu_out_apply.1} parent=39 // pred_region
              // Predicated region
              $region56: #{global_glu_out_apply.1} parent=43 // pred_check
                _
              $region57: #{global_glu_out_apply.1} parent=43 // pred_check_branch
                %232 = sbr.rel (0) target = $region59
              $region58: #{global_glu_out_apply.1} parent=43 // pred_region
                loop: start=0, step=1, limit=1
                $region60: #{global_glu_out_apply.1} parent=58 // loop_pre_header
                  _
                $region61: #{global_glu_out_apply.1} parent=58 // loop_header
                  %s234 = sphi 0, %s238
                  %p235 = scmp.ge.s32.totalorder %s234, 1
                  %s239 = sphi %s211, %s211
                  %s240 = sphi %s209, %s209
                $region62: #{global_glu_out_apply.1} parent=58 // loop_header_branch
                  %237 = sbr.rel (%p235) target = $region66
                $region63: #{global_glu_out_apply.1} parent=58 // loop_body
                  _
                $region64: #{global_glu_out_apply.1} parent=58 // loop_footer
                  %s238 = sadd.s32 1, %s234
                $region65: #{global_glu_out_apply.1} parent=58 // loop_footer_branch
                  %233 = sbr.rel target = $region61
                $region66: #{global_glu_out_apply.1} parent=58 // loop_exit
                  _
                loop: start=0, step=1, limit=1
                $region67: #{global_glu_out_apply.1} parent=58 // loop_pre_header
                  _
                $region68: #{global_glu_out_apply.1} parent=58 // loop_header
                  %s243 = sphi 0, %s247
                  %p244 = scmp.ge.s32.totalorder %s243, 1
                  %s248 = sphi %s211, %s211
                  %s249 = sphi %s209, %s209
                $region69: #{global_glu_out_apply.1} parent=58 // loop_header_branch
                  %246 = sbr.rel (%p244) target = $region73
                $region70: #{global_glu_out_apply.1} parent=58 // loop_body
                  %v250 = vld [vmem:[%s248] sm:$0xf]
                  %251 = vst [vmem:[%s249] sm:$0xf] %v250
                  %v252 = vld [vmem:[%s248 + $0x8] sm:$0xf]
                  %253 = vst [vmem:[%s249 + $0x4] sm:$0xf] %v252
                $region71: #{global_glu_out_apply.1} parent=58 // loop_footer
                  %s247 = sadd.s32 1, %s243
                $region72: #{global_glu_out_apply.1} parent=58 // loop_footer_branch
                  %242 = sbr.rel target = $region68
                $region73: #{global_glu_out_apply.1} parent=58 // loop_exit
                  _
              $region59: #{global_glu_out_apply.1} parent=43 // pred_fallthru
                _
            $region44: #{global_glu_out_apply.1} parent=39 // pred_fallthru
              _
            // Predicated region
            $region45: #{global_glu_out_apply.1} parent=39 // pred_check
              _
            $region46: #{global_glu_out_apply.1} parent=39 // pred_check_branch
              %217 = sbr.rel (0) target = $region48
            $region47: #{global_glu_out_apply.1} parent=39 // pred_region
              loop: start=0, step=1, limit=1
              $region49: #{global_glu_out_apply.1} parent=47 // loop_pre_header
                _
              $region50: #{global_glu_out_apply.1} parent=47 // loop_header
                %s220 = sphi 0, %s224
                %p221 = scmp.ge.s32.totalorder %s220, 1
                %s225 = sphi %s211, %s211
                %s226 = sphi %s209, %s209
              $region51: #{global_glu_out_apply.1} parent=47 // loop_header_branch
                %223 = sbr.rel (%p221) target = $region55
              $region52: #{global_glu_out_apply.1} parent=47 // loop_body
                %v227 = vld [vmem:[%s225] sm:$0xf]
                %228 = vst [vmem:[%s226] sm:$0xf] %v227
                %v229 = vld [vmem:[%s225 + $0x8] sm:$0xf]
                %230 = vst [vmem:[%s226 + $0x4] sm:$0xf] %v229
              $region53: #{global_glu_out_apply.1} parent=47 // loop_footer
                %s224 = sadd.s32 1, %s220
              $region54: #{global_glu_out_apply.1} parent=47 // loop_footer_branch
                %219 = sbr.rel target = $region50
              $region55: #{global_glu_out_apply.1} parent=47 // loop_exit
                _
            $region48: #{global_glu_out_apply.1} parent=39 // pred_fallthru
              _
          $region40: #{global_glu_out_apply.1} parent=35 // pred_fallthru
            _
          %254 = vnop
        $region36: #{global_glu_out_apply.1} parent=31 // pred_fallthru
          _
        // Predicated region
        $region74: #{global_glu_out_apply.1} parent=31 // pred_check
          %p255 = pneg %p82
        $region75: #{global_glu_out_apply.1} parent=31 // pred_check_branch
          %257 = sbr.rel (%p255) target = $region77
        $region76: #{global_glu_out_apply.1} parent=31 // pred_region
          %s258 = sand.u32 %s72, 1
          %s259 = scalar_lea.sflag [#allocation5], %s258
          %s260 = sand.u32 %s72, 1
          %s261 = smul.addr %s260, 256
          %s262 = scalar_lea.vmem [#allocation4], %s261
          %s263 = smul.u32 16, %s15
          %s265 = ssub.s32 4096, 4096
          %266 = vsyncadd %s259, %s265
          %s267 = smul.addr %s263, 4
          %s268 = smul.addr %s267, 64
          %s269 = scalar_lea.hbm %s2, %s268
          %s270 = sshll.u32 %s262, 4
          %s271 = int_to_ptr.vmem [resolvable:$true] %s270
          %276 = dma.hbm_to_vmem [thread:$0]  %s269, 4096, %s271, %s259, 256, 256, 16
        $region77: #{global_glu_out_apply.1} parent=31 // pred_fallthru
          _
      $region32: #{global_glu_out_apply.1} parent=5 // pred_fallthru
        _
      %p277 = scmp.le.s32.totalorder 1, %s15
      %p278 = scmp.lt.s32.totalorder %s15, 3
      %p279 = pnand %p277, %p278
      %p280 = pneg %p279
      // Predicated region
      $region78: #{global_glu_out_apply.1} parent=5 // pred_check
        _
      $region79: #{global_glu_out_apply.1} parent=5 // pred_check_branch
        %282 = sbr.rel (%p279) target = $region81
      $region80: #{global_glu_out_apply.1} parent=5 // pred_region
        %s283 = ssub.s32 %s15, 1
        %s284 = sand.u32 %s49, 1
        %s285 = sand.u32 %s49, 1
        %s286 = smul.addr %s285, 8
        %s287 = scalar_lea.vmem [#allocation3], %s286
        // Predicated region
        $region82: #{global_glu_out_apply.1} parent=80 // pred_check
          %p288 = pneg %p62
        $region83: #{global_glu_out_apply.1} parent=80 // pred_check_branch
          %290 = sbr.rel (%p288) target = $region85
        $region84: #{global_glu_out_apply.1} parent=80 // pred_region
          _
        $region85: #{global_glu_out_apply.1} parent=80 // pred_fallthru
          _
        %s291 = sand.u32 %s75, 1
        %s292 = scalar_lea.sflag [#allocation5], %s291
        %s293 = sand.u32 %s75, 1
        %s294 = smul.addr %s293, 256
        %s295 = scalar_lea.vmem [#allocation4], %s294
        // Predicated region
        $region86: #{global_glu_out_apply.1} parent=80 // pred_check
          %p296 = pneg %p88
        $region87: #{global_glu_out_apply.1} parent=80 // pred_check_branch
          %298 = sbr.rel (%p296) target = $region89
        $region88: #{global_glu_out_apply.1} parent=80 // pred_region
          %299 = dma.done %s292, 4096
        $region89: #{global_glu_out_apply.1} parent=80 // pred_fallthru
          _
        %p300 = pneg %p36
        %p301 = pneg %p33
        %s302 = sand.u32 %s49, 1
        %s303 = sand.u32 %s49, 1
        %s304 = smul.addr %s303, 8
        %s305 = scalar_lea.vmem [#allocation3], %s304
        %p306 = pneg %p62
        %p307 = pneg %p59
        %s308 = sand.u32 %s75, 1
        %s309 = scalar_lea.sflag [#allocation5], %s308
        %s310 = sand.u32 %s75, 1
        %s311 = smul.addr %s310, 256
        %s312 = scalar_lea.vmem [#allocation4], %s311
        %p313 = pneg %p88
        %p314 = pneg %p85
        %p315 = pneg %p109
        %p316 = pneg %p106
        %p317 = pneg %p130
        %p318 = pneg %p127
        %p319 = pneg %p151
        %p320 = pneg %p148
        %p321 = pneg %p172
        %p322 = pneg %p169
        %s323 = smul.u32 16, %s20
        %p325 = scmp.eq.s32.totalorder %s20, 0
        // Predicated region
        $region90: #{global_glu_out_apply.1} parent=80 // pred_check
          %p326 = pneg %p325
        $region91: #{global_glu_out_apply.1} parent=80 // pred_check_branch
          %328 = sbr.rel (%p326) target = $region93
        $region92: #{global_glu_out_apply.1} parent=80 // pred_region
          %329 = vst [vmem:[#allocation2] sm:$0xff] 0.0
          %330 = vst [vmem:[#allocation2 + $0x8] sm:$0xff] 0.0
          %331 = vst [vmem:[#allocation2 + $0x10] sm:$0xff] 0.0
          %332 = vst [vmem:[#allocation2 + $0x18] sm:$0xff] 0.0
          %333 = vst [vmem:[#allocation2 + $0x20] sm:$0xff] 0.0
          %334 = vst [vmem:[#allocation2 + $0x28] sm:$0xff] 0.0
          %335 = vst [vmem:[#allocation2 + $0x30] sm:$0xff] 0.0
          %336 = vst [vmem:[#allocation2 + $0x38] sm:$0xff] 0.0
        $region93: #{global_glu_out_apply.1} parent=80 // pred_fallthru
          _
        %v337 = vld [vmem:[#allocation2] sm:$0xff]
        %v338 = vld [vmem:[#allocation2 + $0x8] sm:$0xff]
        %v339 = vld [vmem:[#allocation2 + $0x10] sm:$0xff]
        %v340 = vld [vmem:[#allocation2 + $0x18] sm:$0xff]
        %v341 = vld [vmem:[#allocation2 + $0x20] sm:$0xff]
        %v342 = vld [vmem:[#allocation2 + $0x28] sm:$0xff]
        %v343 = vld [vmem:[#allocation2 + $0x30] sm:$0xff]
        %v344 = vld [vmem:[#allocation2 + $0x38] sm:$0xff]
        %v345 = vld [vmem:[%s287] sm:$0xf]
        %v346 = vld [vmem:[%s287 + $0x4] sm:$0xf]
        %v347 = vld [vmem:[%s295] sm:$0xff]
        %v348 = vld [vmem:[%s295 + $0x8] sm:$0xff]
        %v349 = vld [vmem:[%s295 + $0x10] sm:$0xff]
        %v350 = vld [vmem:[%s295 + $0x18] sm:$0xff]
        %v351 = vld [vmem:[%s295 + $0x20] sm:$0xff]
        %v352 = vld [vmem:[%s295 + $0x28] sm:$0xff]
        %v353 = vld [vmem:[%s295 + $0x30] sm:$0xff]
        %v354 = vld [vmem:[%s295 + $0x38] sm:$0xff]
        %v355 = vld [vmem:[%s295 + $0x40] sm:$0xff]
        %v356 = vld [vmem:[%s295 + $0x48] sm:$0xff]
        %v357 = vld [vmem:[%s295 + $0x50] sm:$0xff]
        %v358 = vld [vmem:[%s295 + $0x58] sm:$0xff]
        %v359 = vld [vmem:[%s295 + $0x60] sm:$0xff]
        %v360 = vld [vmem:[%s295 + $0x68] sm:$0xff]
        %v361 = vld [vmem:[%s295 + $0x70] sm:$0xff]
        %v362 = vld [vmem:[%s295 + $0x78] sm:$0xff]
        %v363 = vld [vmem:[%s295 + $0x80] sm:$0xff]
        %v364 = vld [vmem:[%s295 + $0x88] sm:$0xff]
        %v365 = vld [vmem:[%s295 + $0x90] sm:$0xff]
        %v366 = vld [vmem:[%s295 + $0x98] sm:$0xff]
        %v367 = vld [vmem:[%s295 + $0xa0] sm:$0xff]
        %v368 = vld [vmem:[%s295 + $0xa8] sm:$0xff]
        %v369 = vld [vmem:[%s295 + $0xb0] sm:$0xff]
        %v370 = vld [vmem:[%s295 + $0xb8] sm:$0xff]
        %v371 = vld [vmem:[%s295 + $0xc0] sm:$0xff]
        %v372 = vld [vmem:[%s295 + $0xc8] sm:$0xff]
        %v373 = vld [vmem:[%s295 + $0xd0] sm:$0xff]
        %v374 = vld [vmem:[%s295 + $0xd8] sm:$0xff]
        %v375 = vld [vmem:[%s295 + $0xe0] sm:$0xff]
        %v376 = vld [vmem:[%s295 + $0xe8] sm:$0xff]
        %v377 = vld [vmem:[%s295 + $0xf0] sm:$0xff]
        %v378 = vld [vmem:[%s295 + $0xf8] sm:$0xff]
        %v381 = vunpack.c.l.b16 %v345
        %v382 = vunpack.c.l.b16 %v346
        %v383 = vpack.c.b16 %v382, %v381
        %v417 = vunpack.c.l.b16 %v347
        %v418 = vunpack.c.h.b16 %v347
        %v419 = vunpack.c.l.b16 %v348
        %v420 = vunpack.c.h.b16 %v348
        %v421 = vunpack.c.l.b16 %v349
        %v422 = vunpack.c.h.b16 %v349
        %v423 = vunpack.c.l.b16 %v350
        %v424 = vunpack.c.h.b16 %v350
        %v425 = vunpack.c.l.b16 %v351
        %v426 = vunpack.c.h.b16 %v351
        %v427 = vunpack.c.l.b16 %v352
        %v428 = vunpack.c.h.b16 %v352
        %v429 = vunpack.c.l.b16 %v353
        %v430 = vunpack.c.h.b16 %v353
        %v431 = vunpack.c.l.b16 %v354
        %v432 = vunpack.c.h.b16 %v354
        %v433 = vunpack.c.l.b16 %v355
        %v434 = vunpack.c.h.b16 %v355
        %v435 = vunpack.c.l.b16 %v356
        %v436 = vunpack.c.h.b16 %v356
        %v437 = vunpack.c.l.b16 %v357
        %v438 = vunpack.c.h.b16 %v357
        %v439 = vunpack.c.l.b16 %v358
        %v440 = vunpack.c.h.b16 %v358
        %v441 = vunpack.c.l.b16 %v359
        %v442 = vunpack.c.h.b16 %v359
        %v443 = vunpack.c.l.b16 %v360
        %v444 = vunpack.c.h.b16 %v360
        %v445 = vunpack.c.l.b16 %v361
        %v446 = vunpack.c.h.b16 %v361
        %v447 = vunpack.c.l.b16 %v362
        %v448 = vunpack.c.h.b16 %v362
        %v449 = vunpack.c.l.b16 %v363
        %v450 = vunpack.c.h.b16 %v363
        %v451 = vunpack.c.l.b16 %v364
        %v452 = vunpack.c.h.b16 %v364
        %v453 = vunpack.c.l.b16 %v365
        %v454 = vunpack.c.h.b16 %v365
        %v455 = vunpack.c.l.b16 %v366
        %v456 = vunpack.c.h.b16 %v366
        %v457 = vunpack.c.l.b16 %v367
        %v458 = vunpack.c.h.b16 %v367
        %v459 = vunpack.c.l.b16 %v368
        %v460 = vunpack.c.h.b16 %v368
        %v461 = vunpack.c.l.b16 %v369
        %v462 = vunpack.c.h.b16 %v369
        %v463 = vunpack.c.l.b16 %v370
        %v464 = vunpack.c.h.b16 %v370
        %v465 = vunpack.c.l.b16 %v371
        %v466 = vunpack.c.h.b16 %v371
        %v467 = vunpack.c.l.b16 %v372
        %v468 = vunpack.c.h.b16 %v372
        %v469 = vunpack.c.l.b16 %v373
        %v470 = vunpack.c.h.b16 %v373
        %v471 = vunpack.c.l.b16 %v374
        %v472 = vunpack.c.h.b16 %v374
        %v473 = vunpack.c.l.b16 %v375
        %v474 = vunpack.c.h.b16 %v375
        %v475 = vunpack.c.l.b16 %v376
        %v476 = vunpack.c.h.b16 %v376
        %v477 = vunpack.c.l.b16 %v377
        %v478 = vunpack.c.h.b16 %v377
        %v479 = vunpack.c.l.b16 %v378
        %v480 = vunpack.c.h.b16 %v378
        %v481 = vpack.c.b16 %v421, %v417
        %v482 = vpack.c.b16 %v422, %v418
        %v483 = vpack.c.b16 %v423, %v419
        %v484 = vpack.c.b16 %v424, %v420
        %v485 = vpack.c.b16 %v429, %v425
        %v486 = vpack.c.b16 %v430, %v426
        %v487 = vpack.c.b16 %v431, %v427
        %v488 = vpack.c.b16 %v432, %v428
        %v489 = vpack.c.b16 %v437, %v433
        %v490 = vpack.c.b16 %v438, %v434
        %v491 = vpack.c.b16 %v439, %v435
        %v492 = vpack.c.b16 %v440, %v436
        %v493 = vpack.c.b16 %v445, %v441
        %v494 = vpack.c.b16 %v446, %v442
        %v495 = vpack.c.b16 %v447, %v443
        %v496 = vpack.c.b16 %v448, %v444
        %v497 = vpack.c.b16 %v453, %v449
        %v498 = vpack.c.b16 %v454, %v450
        %v499 = vpack.c.b16 %v455, %v451
        %v500 = vpack.c.b16 %v456, %v452
        %v501 = vpack.c.b16 %v461, %v457
        %v502 = vpack.c.b16 %v462, %v458
        %v503 = vpack.c.b16 %v463, %v459
        %v504 = vpack.c.b16 %v464, %v460
        %v505 = vpack.c.b16 %v469, %v465
        %v506 = vpack.c.b16 %v470, %v466
        %v507 = vpack.c.b16 %v471, %v467
        %v508 = vpack.c.b16 %v472, %v468
        %v509 = vpack.c.b16 %v477, %v473
        %v510 = vpack.c.b16 %v478, %v474
        %v511 = vpack.c.b16 %v479, %v475
        %v512 = vpack.c.b16 %v480, %v476
        %545 = vmatprep.subr.bf16.mxu0 %v482
        %546 = vmatpush1.bf16.msra.mxu0 %v481
        %547 = vmatprep.subr.bf16.mxu0 %v486
        %548 = vmatpush1.bf16.msra.mxu0 %v485
        %549 = vmatprep.subr.bf16.mxu0 %v490
        %550 = vmatpush1.bf16.msra.mxu0 %v489
        %551 = vmatprep.subr.bf16.mxu0 %v494
        %552 = vmatpush1.bf16.msra.mxu0 %v493
        %553 = vmatprep.subr.bf16.mxu0 %v498
        %554 = vmatpush1.bf16.msra.mxu0 %v497
        %555 = vmatprep.subr.bf16.mxu0 %v502
        %556 = vmatpush1.bf16.msra.mxu0 %v501
        %557 = vmatprep.subr.bf16.mxu0 %v506
        %558 = vmatpush1.bf16.msra.mxu0 %v505
        %559 = vmatprep.subr.bf16.mxu0 %v510
        %560 = vmatpush1.bf16.msra.mxu0 %v509
        %561 = vmatprep.subr.bf16.mxu0 0
        %562 = vmatpush1.bf16.msra.mxu0 0
        %563 = vmatprep.subr.bf16.mxu0 0
        %564 = vmatpush1.bf16.msra.mxu0 0
        %565 = vmatprep.subr.bf16.mxu0 0
        %566 = vmatpush1.bf16.msra.mxu0 0
        %567 = vmatprep.subr.bf16.mxu0 0
        %568 = vmatpush1.bf16.msra.mxu0 0
        %569 = vmatprep.subr.bf16.mxu0 0
        %570 = vmatpush1.bf16.msra.mxu0 0
        %571 = vmatprep.subr.bf16.mxu0 0
        %572 = vmatpush1.bf16.msra.mxu0 0
        %573 = vmatprep.subr.bf16.mxu0 0
        %574 = vmatpush1.bf16.msra.mxu0 0
        %575 = vmatprep.subr.bf16.mxu0 0
        %576 = vmatpush1.bf16.msra.mxu0 0
        %577 = vmatprep.mubr.bf16.mxu0 0
        %578 = vmatmul.mubr.bf16.gmra.mrb[0].mxu0 %v383
        %v579 = vpop.f32.mrb[0].mxu0
        %v580 = vadd.f32 0.0, %v579
        %v581 = vpop.f32.mrb[0].mxu0
        %v582 = vadd.f32 0.0, %v581
        %v583 = vpop.f32.mrb[0].mxu0
        %v584 = vadd.f32 0.0, %v583
        %v585 = vpop.f32.mrb[0].mxu0
        %v586 = vadd.f32 0.0, %v585
        %587 = vdwg.mxu0
        %588 = vmatprep.subr.bf16.mxu0 %v484
        %589 = vmatpush1.bf16.msra.mxu0 %v483
        %590 = vmatprep.subr.bf16.mxu0 %v488
        %591 = vmatpush1.bf16.msra.mxu0 %v487
        %592 = vmatprep.subr.bf16.mxu0 %v492
        %593 = vmatpush1.bf16.msra.mxu0 %v491
        %594 = vmatprep.subr.bf16.mxu0 %v496
        %595 = vmatpush1.bf16.msra.mxu0 %v495
        %596 = vmatprep.subr.bf16.mxu0 %v500
        %597 = vmatpush1.bf16.msra.mxu0 %v499
        %598 = vmatprep.subr.bf16.mxu0 %v504
        %599 = vmatpush1.bf16.msra.mxu0 %v503
        %600 = vmatprep.subr.bf16.mxu0 %v508
        %601 = vmatpush1.bf16.msra.mxu0 %v507
        %602 = vmatprep.subr.bf16.mxu0 %v512
        %603 = vmatpush1.bf16.msra.mxu0 %v511
        %604 = vmatprep.subr.bf16.mxu0 0
        %605 = vmatpush1.bf16.msra.mxu0 0
        %606 = vmatprep.subr.bf16.mxu0 0
        %607 = vmatpush1.bf16.msra.mxu0 0
        %608 = vmatprep.subr.bf16.mxu0 0
        %609 = vmatpush1.bf16.msra.mxu0 0
        %610 = vmatprep.subr.bf16.mxu0 0
        %611 = vmatpush1.bf16.msra.mxu0 0
        %612 = vmatprep.subr.bf16.mxu0 0
        %613 = vmatpush1.bf16.msra.mxu0 0
        %614 = vmatprep.subr.bf16.mxu0 0
        %615 = vmatpush1.bf16.msra.mxu0 0
        %616 = vmatprep.subr.bf16.mxu0 0
        %617 = vmatpush1.bf16.msra.mxu0 0
        %618 = vmatprep.subr.bf16.mxu0 0
        %619 = vmatpush1.bf16.msra.mxu0 0
        %620 = vmatprep.mubr.bf16.mxu0 0
        %621 = vmatmul.mubr.bf16.gmra.mrb[0].mxu0 %v383
        %v622 = vpop.f32.mrb[0].mxu0
        %v623 = vadd.f32 0.0, %v622
        %v624 = vpop.f32.mrb[0].mxu0
        %v625 = vadd.f32 0.0, %v624
        %v626 = vpop.f32.mrb[0].mxu0
        %v627 = vadd.f32 0.0, %v626
        %v628 = vpop.f32.mrb[0].mxu0
        %v629 = vadd.f32 0.0, %v628
        %630 = vdwg.mxu0
        %v631 = vadd.f32 %v337, %v580
        %v632 = vadd.f32 %v338, %v582
        %v633 = vadd.f32 %v339, %v623
        %v634 = vadd.f32 %v340, %v625
        %v635 = vadd.f32 %v341, %v584
        %v636 = vadd.f32 %v342, %v586
        %v637 = vadd.f32 %v343, %v627
        %v638 = vadd.f32 %v344, %v629
        %639 = vst [vmem:[#allocation2] sm:$0xff] %v631
        %640 = vst [vmem:[#allocation2 + $0x8] sm:$0xff] %v632
        %641 = vst [vmem:[#allocation2 + $0x10] sm:$0xff] %v633
        %642 = vst [vmem:[#allocation2 + $0x18] sm:$0xff] %v634
        %643 = vst [vmem:[#allocation2 + $0x20] sm:$0xff] %v635
        %644 = vst [vmem:[#allocation2 + $0x28] sm:$0xff] %v636
        %645 = vst [vmem:[#allocation2 + $0x30] sm:$0xff] %v637
        %646 = vst [vmem:[#allocation2 + $0x38] sm:$0xff] %v638
        %p647 = scmp.eq.s32.totalorder %s20, 1
        // Predicated region
        $region94: #{global_glu_out_apply.1} parent=80 // pred_check
          %p648 = pneg %p647
        $region95: #{global_glu_out_apply.1} parent=80 // pred_check_branch
          %650 = sbr.rel (%p648) target = $region97
        $region96: #{global_glu_out_apply.1} parent=80 // pred_region
          %v651 = vld [vmem:[%s0] sm:$0xff]
          %v652 = vld [vmem:[%s0 + $0x8] sm:$0xff]
          %v653 = vld [vmem:[%s0 + $0x10] sm:$0xff]
          %v654 = vld [vmem:[%s0 + $0x18] sm:$0xff]
          %v655 = vld [vmem:[#allocation2] sm:$0xff]
          %v656 = vld [vmem:[#allocation2 + $0x8] sm:$0xff]
          %v657 = vld [vmem:[#allocation2 + $0x10] sm:$0xff]
          %v658 = vld [vmem:[#allocation2 + $0x18] sm:$0xff]
          %v659 = vld [vmem:[#allocation2 + $0x20] sm:$0xff]
          %v660 = vld [vmem:[#allocation2 + $0x28] sm:$0xff]
          %v661 = vld [vmem:[#allocation2 + $0x30] sm:$0xff]
          %v662 = vld [vmem:[#allocation2 + $0x38] sm:$0xff]
          %v663 = vmul.f32 %v655, %v651
          %v664 = vmul.f32 %v656, %v652
          %v665 = vmul.f32 %v659, %v653
          %v666 = vmul.f32 %v660, %v654
          %v667 = vpack.c.bf16 %v665, %v663
          %v668 = vpack.c.bf16 %v666, %v664
          %v669 = vld [vmem:[%s3] sm:$0xf]
          %v670 = vld [vmem:[%s3 + $0x4] sm:$0xf]
          %v671 = vld [vmem:[%s3 + $0x8] sm:$0xf]
          %v672 = vld [vmem:[%s3 + $0xc] sm:$0xf]
          %v673 = vld [vmem:[%s3 + $0x10] sm:$0xf]
          %v674 = vld [vmem:[%s3 + $0x14] sm:$0xf]
          %v675 = vld [vmem:[%s3 + $0x18] sm:$0xf]
          %v676 = vld [vmem:[%s3 + $0x1c] sm:$0xf]
          %v677 = vld [vmem:[%s3 + $0x20] sm:$0xf]
          %v678 = vld [vmem:[%s3 + $0x24] sm:$0xf]
          %v679 = vld [vmem:[%s3 + $0x28] sm:$0xf]
          %v680 = vld [vmem:[%s3 + $0x2c] sm:$0xf]
          %v681 = vld [vmem:[%s3 + $0x30] sm:$0xf]
          %v682 = vld [vmem:[%s3 + $0x34] sm:$0xf]
          %v683 = vld [vmem:[%s3 + $0x38] sm:$0xf]
          %v684 = vld [vmem:[%s3 + $0x3c] sm:$0xf]
          %v685 = vld [vmem:[%s3 + $0x40] sm:$0xf]
          %v686 = vld [vmem:[%s3 + $0x44] sm:$0xf]
          %v687 = vld [vmem:[%s3 + $0x48] sm:$0xf]
          %v688 = vld [vmem:[%s3 + $0x4c] sm:$0xf]
          %v689 = vld [vmem:[%s3 + $0x50] sm:$0xf]
          %v690 = vld [vmem:[%s3 + $0x54] sm:$0xf]
          %v691 = vld [vmem:[%s3 + $0x58] sm:$0xf]
          %v692 = vld [vmem:[%s3 + $0x5c] sm:$0xf]
          %v693 = vld [vmem:[%s3 + $0x60] sm:$0xf]
          %v694 = vld [vmem:[%s3 + $0x64] sm:$0xf]
          %v695 = vld [vmem:[%s3 + $0x68] sm:$0xf]
          %v696 = vld [vmem:[%s3 + $0x6c] sm:$0xf]
          %v697 = vld [vmem:[%s3 + $0x70] sm:$0xf]
          %v698 = vld [vmem:[%s3 + $0x74] sm:$0xf]
          %v699 = vld [vmem:[%s3 + $0x78] sm:$0xf]
          %v700 = vld [vmem:[%s3 + $0x7c] sm:$0xf]
          %v733 = vunpack.c.l.b16 %v669
          %v734 = vunpack.c.l.b16 %v670
          %v735 = vunpack.c.l.b16 %v671
          %v736 = vunpack.c.l.b16 %v672
          %v737 = vunpack.c.l.b16 %v673
          %v738 = vunpack.c.l.b16 %v674
          %v739 = vunpack.c.l.b16 %v675
          %v740 = vunpack.c.l.b16 %v676
          %v741 = vunpack.c.l.b16 %v677
          %v742 = vunpack.c.l.b16 %v678
          %v743 = vunpack.c.l.b16 %v679
          %v744 = vunpack.c.l.b16 %v680
          %v745 = vunpack.c.l.b16 %v681
          %v746 = vunpack.c.l.b16 %v682
          %v747 = vunpack.c.l.b16 %v683
          %v748 = vunpack.c.l.b16 %v684
          %v749 = vunpack.c.l.b16 %v685
          %v750 = vunpack.c.l.b16 %v686
          %v751 = vunpack.c.l.b16 %v687
          %v752 = vunpack.c.l.b16 %v688
          %v753 = vunpack.c.l.b16 %v689
          %v754 = vunpack.c.l.b16 %v690
          %v755 = vunpack.c.l.b16 %v691
          %v756 = vunpack.c.l.b16 %v692
          %v757 = vunpack.c.l.b16 %v693
          %v758 = vunpack.c.l.b16 %v694
          %v759 = vunpack.c.l.b16 %v695
          %v760 = vunpack.c.l.b16 %v696
          %v761 = vunpack.c.l.b16 %v697
          %v762 = vunpack.c.l.b16 %v698
          %v763 = vunpack.c.l.b16 %v699
          %v764 = vunpack.c.l.b16 %v700
          %v765 = vpack.c.b16 %v734, %v733
          %v766 = vpack.c.b16 %v736, %v735
          %v767 = vpack.c.b16 %v738, %v737
          %v768 = vpack.c.b16 %v740, %v739
          %v769 = vpack.c.b16 %v742, %v741
          %v770 = vpack.c.b16 %v744, %v743
          %v771 = vpack.c.b16 %v746, %v745
          %v772 = vpack.c.b16 %v748, %v747
          %v773 = vpack.c.b16 %v750, %v749
          %v774 = vpack.c.b16 %v752, %v751
          %v775 = vpack.c.b16 %v754, %v753
          %v776 = vpack.c.b16 %v756, %v755
          %v777 = vpack.c.b16 %v758, %v757
          %v778 = vpack.c.b16 %v760, %v759
          %v779 = vpack.c.b16 %v762, %v761
          %v780 = vpack.c.b16 %v764, %v763
          %797 = vmatprep.subr.bf16.mxu0 0
          %798 = vmatpush1.bf16.msra.mxu0 %v765
          %799 = vmatprep.subr.bf16.mxu0 0
          %800 = vmatpush1.bf16.msra.mxu0 %v766
          %801 = vmatprep.subr.bf16.mxu0 0
          %802 = vmatpush1.bf16.msra.mxu0 %v767
          %803 = vmatprep.subr.bf16.mxu0 0
          %804 = vmatpush1.bf16.msra.mxu0 %v768
          %805 = vmatprep.subr.bf16.mxu0 0
          %806 = vmatpush1.bf16.msra.mxu0 %v769
          %807 = vmatprep.subr.bf16.mxu0 0
          %808 = vmatpush1.bf16.msra.mxu0 %v770
          %809 = vmatprep.subr.bf16.mxu0 0
          %810 = vmatpush1.bf16.msra.mxu0 %v771
          %811 = vmatprep.subr.bf16.mxu0 0
          %812 = vmatpush1.bf16.msra.mxu0 %v772
          %813 = vmatprep.subr.bf16.mxu0 0
          %814 = vmatpush1.bf16.msra.mxu0 %v773
          %815 = vmatprep.subr.bf16.mxu0 0
          %816 = vmatpush1.bf16.msra.mxu0 %v774
          %817 = vmatprep.subr.bf16.mxu0 0
          %818 = vmatpush1.bf16.msra.mxu0 %v775
          %819 = vmatprep.subr.bf16.mxu0 0
          %820 = vmatpush1.bf16.msra.mxu0 %v776
          %821 = vmatprep.subr.bf16.mxu0 0
          %822 = vmatpush1.bf16.msra.mxu0 %v777
          %823 = vmatprep.subr.bf16.mxu0 0
          %824 = vmatpush1.bf16.msra.mxu0 %v778
          %825 = vmatprep.subr.bf16.mxu0 0
          %826 = vmatpush1.bf16.msra.mxu0 %v779
          %827 = vmatprep.subr.bf16.mxu0 0
          %828 = vmatpush1.bf16.msra.mxu0 %v780
          %829 = vmatprep.mubr.bf16.mxu0 %v668
          %830 = vmatmul.mubr.bf16.gmra.mrb[0].mxu0 %v667
          %v831 = vpop.f32.mrb[0].mxu0
          %v832 = vadd.f32 0.0, %v831
          %v833 = vpop.f32.mrb[0].mxu0
          %v834 = vpop.f32.mrb[0].mxu0
          %v835 = vadd.f32 0.0, %v834
          %v836 = vpop.f32.mrb[0].mxu0
          %837 = vdwg.mxu0
          %v838 = vpack.c.bf16 %v835, %v832
          %v839 = vld [vmem:[%s4] sm:$0xff]
          %v840 = vld [vmem:[%s4 + $0x8] sm:$0xff]
          %v843 = vunpack.c.l.b16 %v839
          %v844 = vunpack.c.h.b16 %v839
          %v845 = vunpack.c.l.b16 %v840
          %v846 = vunpack.c.h.b16 %v840
          %v847 = vpack.c.b16 %v845, %v843
          %v848 = vpack.c.b16 %v846, %v844
          %vm851 = vcmask 130048
          %v853 = vsel %vm851, %v838, 0
          %855 = vmatprep.subr.bf16.mxu0 %v848
          %856 = vmatpush1.bf16.msra.mxu0 %v847
          %857 = vmatprep.subr.bf16.mxu0 0
          %858 = vmatpush1.bf16.msra.mxu0 0
          %859 = vmatprep.subr.bf16.mxu0 0
          %860 = vmatpush1.bf16.msra.mxu0 0
          %861 = vmatprep.subr.bf16.mxu0 0
          %862 = vmatpush1.bf16.msra.mxu0 0
          %863 = vmatprep.subr.bf16.mxu0 0
          %864 = vmatpush1.bf16.msra.mxu0 0
          %865 = vmatprep.subr.bf16.mxu0 0
          %866 = vmatpush1.bf16.msra.mxu0 0
          %867 = vmatprep.subr.bf16.mxu0 0
          %868 = vmatpush1.bf16.msra.mxu0 0
          %869 = vmatprep.subr.bf16.mxu0 0
          %870 = vmatpush1.bf16.msra.mxu0 0
          %871 = vmatprep.subr.bf16.mxu0 0
          %872 = vmatpush1.bf16.msra.mxu0 0
          %873 = vmatprep.subr.bf16.mxu0 0
          %874 = vmatpush1.bf16.msra.mxu0 0
          %875 = vmatprep.subr.bf16.mxu0 0
          %876 = vmatpush1.bf16.msra.mxu0 0
          %877 = vmatprep.subr.bf16.mxu0 0
          %878 = vmatpush1.bf16.msra.mxu0 0
          %879 = vmatprep.subr.bf16.mxu0 0
          %880 = vmatpush1.bf16.msra.mxu0 0
          %881 = vmatprep.subr.bf16.mxu0 0
          %882 = vmatpush1.bf16.msra.mxu0 0
          %883 = vmatprep.subr.bf16.mxu0 0
          %884 = vmatpush1.bf16.msra.mxu0 0
          %885 = vmatprep.subr.bf16.mxu0 0
          %886 = vmatpush1.bf16.msra.mxu0 0
          %887 = vmatprep.mubr.bf16.mxu0 0
          %888 = vmatmul.mubr.bf16.gmra.mrb[0].mxu0 %v853
          %v889 = vpop.f32.mrb[0].mxu0
          %v890 = vadd.f32 0.0, %v889
          %v891 = vpop.f32.mrb[0].mxu0
          %v892 = vadd.f32 0.0, %v891
          %v893 = vpop.f32.mrb[0].mxu0
          %v894 = vadd.f32 0.0, %v893
          %v895 = vpop.f32.mrb[0].mxu0
          %v896 = vadd.f32 0.0, %v895
          %897 = vdwg.mxu0
          %v898 = vld [vmem:[%s5] sm:$0xff]
          %v899 = vld [vmem:[%s5 + $0x8] sm:$0xff]
          %v900 = vld [vmem:[%s5 + $0x10] sm:$0xff]
          %v901 = vld [vmem:[%s5 + $0x18] sm:$0xff]
          %v902 = vmul.f32 %v890, %v898
          %v903 = vmul.f32 %v892, %v899
          %v904 = vmul.f32 %v894, %v900
          %v905 = vmul.f32 %v896, %v901
          %v906 = vadd.f32 %v902, %v904
          %v907 = vrot.slane %v906, 4
          %v908 = vadd.f32 %v906, %v907
          %v909 = vrot.slane %v908, 2
          %v910 = vadd.f32 %v908, %v909
          %v911 = vrot.slane %v910, 1
          %v912 = vadd.f32 %v910, %v911
          %v913 = vadd.f32 %v903, %v905
          %v914 = vrot.slane %v913, 4
          %v915 = vadd.f32 %v913, %v914
          %v916 = vrot.slane %v915, 2
          %v917 = vadd.f32 %v915, %v916
          %v918 = vrot.slane %v917, 1
          %v919 = vadd.f32 %v917, %v918
          %v920 = vsub.f32 0.0, %v912
          %v921 = vsub.f32 0.0, %v919
          %v922 = vmul.f32 %v920, 1.442695
          %v923 = vpow.pop %v922
          %v924 = vmul.f32 %v921, 1.442695
          %v925 = vpow.pop %v924
          %v926 = vadd.f32 %v923, 1.0
          %v927 = vadd.f32 %v925, 1.0
          %v928 = vrcp.pop %v926
          %v929 = vrcp.pop %v927
          %v930 = vmul.f32 %v657, %v651
          %v931 = vmul.f32 %v658, %v652
          %v932 = vmul.f32 %v661, %v653
          %v933 = vmul.f32 %v662, %v654
          %v934 = vsub.f32 %v930, %v651
          %v935 = vsub.f32 %v931, %v652
          %v936 = vsub.f32 %v932, %v653
          %v937 = vsub.f32 %v933, %v654
          %v938 = vmul.f32 %v934, %v928
          %v939 = vmul.f32 %v935, %v929
          %v940 = vmul.f32 %v936, %v928
          %v941 = vmul.f32 %v937, %v929
          %v942 = vadd.f32 %v651, %v938
          %v943 = vadd.f32 %v652, %v939
          %v944 = vadd.f32 %v653, %v940
          %v945 = vadd.f32 %v654, %v941
          %946 = vst [vmem:[%s6] sm:$0xff] %v942
          %947 = vst [vmem:[%s6 + $0x8] sm:$0xff] %v943
          %948 = vst [vmem:[%s6 + $0x10] sm:$0xff] %v944
          %949 = vst [vmem:[%s6 + $0x18] sm:$0xff] %v945
        $region97: #{global_glu_out_apply.1} parent=80 // pred_fallthru
          _
        // Predicated region
        $region98: #{global_glu_out_apply.1} parent=80 // pred_check
          %p950 = pneg %p169
        $region99: #{global_glu_out_apply.1} parent=80 // pred_check_branch
          %952 = sbr.rel (%p950) target = $region101
        $region100: #{global_glu_out_apply.1} parent=80 // pred_region
          _
        $region101: #{global_glu_out_apply.1} parent=80 // pred_fallthru
          _
        // Predicated region
        $region102: #{global_glu_out_apply.1} parent=80 // pred_check
          %p953 = pneg %p169
        $region103: #{global_glu_out_apply.1} parent=80 // pred_check_branch
          %955 = sbr.rel (%p953) target = $region105
        $region104: #{global_glu_out_apply.1} parent=80 // pred_region
          _
        $region105: #{global_glu_out_apply.1} parent=80 // pred_fallthru
          _
      $region81: #{global_glu_out_apply.1} parent=5 // pred_fallthru
        _
      %p956 = scmp.le.s32.totalorder 2, %s15
      // Predicated region
      $region106: #{global_glu_out_apply.1} parent=5 // pred_check
        %p957 = pneg %p956
      $region107: #{global_glu_out_apply.1} parent=5 // pred_check_branch
        %959 = sbr.rel (%p957) target = $region109
      $region108: #{global_glu_out_apply.1} parent=5 // pred_region
        %s960 = ssub.s32 %s15, 2
      $region109: #{global_glu_out_apply.1} parent=5 // pred_fallthru
        _
    $region6: #{global_glu_out_apply.1} parent=1 // loop_footer
      %s19 = sadd.s32 1, %s15
    $region7: #{global_glu_out_apply.1} parent=1 // loop_footer_branch
      %14 = sbr.rel target = $region3
    $region8: #{global_glu_out_apply.1} parent=1 // loop_exit
      _
    %961 = vsyncpa [#allocation5], 1
    %s962 = scalar_lea.sflag [#allocation5], 1
    %963 = vsyncpa %s962, 1

</llo_original>
